<compile_context>
chip_gen: v5e
topology: v5e:2x2
jax: 0.10.0
libtpu: 0.0.40
codegen_flags: <defaults>
</compile_context>

<pallas_src>
import functools
import math

import jax
import jax.numpy as jnp
from jax import lax
from jax.experimental import pallas as pl
from jax.experimental.pallas import tpu as pltpu

BN_EPS = 1e-5  # nn.BatchNorm2d default eps


def _round_up(x, m):
    return ((x + m - 1) // m) * m


def _choose_point_tile(npoint, nsample, target_rows=4096):
    """Largest divisor TP of npoint with TP*nsample <= target_rows and TP a legal sublane block
    (TP == npoint or TP % 8 == 0)."""
    best = None
    for d in range(1, npoint + 1):
        if npoint % d != 0:
            continue
        if d != npoint and d % 8 != 0:
            continue
        if d * nsample <= target_rows:
            best = d
    if best is None:  # nothing fits the target: take the smallest legal divisor
        for d in range(1, npoint + 1):
            if npoint % d == 0 and (d == npoint or d % 8 == 0):
                best = d
                break
    return best


# ----------------------------- Pallas kernel -----------------------------

def _mlp_maxpool_kernel(*refs, num_layers, tp, nsample):
    """Fused shared-MLP (1x1 conv + folded BN + ReLU) stack + max-pool over nsample.

    refs = (x_ref, w_0, b_0, ..., w_{L-1}, b_{L-1}, o_ref)
      x_ref : (1, TP, nsample, C_in_pad)  bf16, point-major (neighbours of a point contiguous)
      w_l   : (C_l, C_{l+1})              bf16, eval-mode BatchNorm folded in
      b_l   : (1, C_{l+1})                f32
      o_ref : (1, TP, C_out)
    """
    x_ref = refs[0]
    o_ref = refs[-1]
    wb = refs[1:-1]

    c_in = x_ref.shape[-1]
    h = x_ref[0].reshape(tp * nsample, c_in)                      # bf16 (rows, C_in_pad)
    for l in range(num_layers):
        w = wb[2 * l][...]                                        # bf16
        b = wb[2 * l + 1][...]                                    # f32 (1, C)
        acc = jnp.dot(h, w, preferred_element_type=jnp.float32) + b
        acc = jnp.maximum(acc, 0.0)                               # ReLU in f32 (v5e-friendly)
        h = acc if l + 1 == num_layers else acc.astype(w.dtype)   # bf16 operand for next matmul

    c_out = h.shape[-1]
    # torch.max(new_points, 3)[0]: contiguous neighbourhood pool (point-major layout).
    pooled = jnp.max(h.reshape(tp, nsample, c_out), axis=1)       # (TP, C_out) f32
    o_ref[0] = pooled.astype(o_ref.dtype)


def pallas_mlp_maxpool(feats, weights, biases, *, out_dtype):
    """feats: (B, npoint, nsample, C_pad) bf16 point-major -> (B, npoint, C_out) out_dtype."""
    B, npoint, nsample, c_pad = feats.shape
    num_layers = len(weights)
    c_out = weights[-1].shape[1]

    tp = _choose_point_tile(npoint, nsample)
    n_ptiles = npoint // tp

    kern = functools.partial(_mlp_maxpool_kernel, num_layers=num_layers,
                             tp=tp, nsample=nsample)

    in_specs = [pl.BlockSpec((1, tp, nsample, c_pad), lambda b, p: (b, p, 0, 0))]
    operands = [feats]
    for w, bvec in zip(weights, biases):
        # TODO(synk): weights are grid-invariant; pipeline_mode=pl.Buffered(1) would single-buffer
        # them, but default double-buffering is kept here for maximal lowering compatibility.
        in_specs.append(pl.BlockSpec(w.shape, lambda b, p: (0, 0)))
        in_specs.append(pl.BlockSpec((1, bvec.shape[0]), lambda b, p: (0, 0)))
        operands.append(w)
        operands.append(bvec.reshape(1, -1).astype(jnp.float32))

    # VMEM budget from the chosen tile: double-buffered in/out blocks + weights + f32 intermediates.
    widths = [c_pad] + [w.shape[1] for w in weights]
    rows = tp * nsample
    out_itemsize = jnp.dtype(out_dtype).itemsize
    wb_bytes = (sum(w.size * w.dtype.itemsize for w in weights)
                + 4 * sum(int(b.size) for b in biases))
    vmem_bytes = (2 * rows * c_pad * feats.dtype.itemsize
                  + 2 * tp * c_out * out_itemsize
                  + 2 * wb_bytes
                  + 3 * rows * max(widths) * 4)
    vmem_limit = int(min(max(vmem_bytes * 3 // 2, 16 << 20), 64 << 20))

    flops = 2 * B * npoint * nsample * sum(a * o for a, o in zip(widths[:-1], widths[1:]))
    bytes_accessed = (feats.size * feats.dtype.itemsize + wb_bytes
                      + B * npoint * c_out * out_itemsize)

    return pl.pallas_call(
        kern,
        out_shape=jax.ShapeDtypeStruct((B, npoint, c_out), out_dtype),
        grid=(B, n_ptiles),
        in_specs=in_specs,
        out_specs=pl.BlockSpec((1, tp, c_out), lambda b, p: (b, p, 0)),
        compiler_params=pltpu.CompilerParams(
            dimension_semantics=("parallel", "parallel"),
            vmem_limit_bytes=vmem_limit),
        cost_estimate=pl.CostEstimate(flops=flops, transcendentals=0,
                                      bytes_accessed=bytes_accessed),
    )(*operands)


# ---------------------- sampling / grouping (XLA glue) ----------------------
# TODO(synk): FPS / ball_query / grouping are data-dependent index gathers kept in plain JAX; an
# in-kernel gather (scalar-prefetched idx + pl.Element / manual DMA) would avoid materializing the
# nsample-x inflated grouped tensor in HBM entirely.

def _batched_gather(feat_t, idx):
    """feat_t: (B, N, C), idx: (B, ...) int -> (B, ..., C) channel-last gather."""
    return jax.vmap(lambda a, i: a[i])(feat_t, idx)


def furthest_point_sample(xyz_t, npoint):
    """xyz_t: (B, N, 3) -> (B, npoint) int32. Matches pointnet2 CUDA FPS (starts at index 0)."""
    B, N, _ = xyz_t.shape

    def body(i, state):
        dists, last_idx, out = state
        last = _batched_gather(xyz_t, last_idx[:, None])              # (B, 1, 3)
        d = jnp.sum((xyz_t - last) ** 2, axis=-1)                     # (B, N)
        dists = jnp.minimum(dists, d)
        new_idx = jnp.argmax(dists, axis=-1).astype(jnp.int32)        # (B,)
        out = out.at[:, i].set(new_idx)
        return dists, new_idx, out

    dists0 = jnp.full((B, N), 1e10, jnp.float32)
    out0 = jnp.zeros((B, npoint), jnp.int32)        # slot 0 == point 0, like the CUDA kernel
    last0 = jnp.zeros((B,), jnp.int32)
    _, _, out = lax.fori_loop(1, npoint, body, (dists0, last0, out0))
    return out


def ball_query(radius, nsample, xyz_t, new_xyz_t):
    """xyz_t: (B, N, 3), new_xyz_t: (B, npoint, 3) -> (B, npoint, nsample) int32.

    pointnet2 semantics: first nsample in-range points (original order); missing slots replicate
    the first hit; fully-empty balls keep index 0 (CUDA initializes the buffer to zeros).
    """
    N = xyz_t.shape[1]
    d2 = jnp.sum((new_xyz_t[:, :, None, :] - xyz_t[:, None, :, :]) ** 2, axis=-1)  # (B, np, N)
    in_range = d2 < (radius * radius)
    cand = jnp.where(in_range, jnp.arange(N, dtype=jnp.int32), jnp.int32(N))
    first_k = jnp.sort(cand, axis=-1)[..., :nsample]                               # (B, np, ns)
    has_any = jnp.any(in_range, axis=-1, keepdims=True)
    first = jnp.where(has_any, first_k[..., :1], jnp.int32(0))
    idx = jnp.where(first_k >= N, first, first_k)
    return idx.astype(jnp.int32)


# ----------------------------- params & forward -----------------------------

def init_pointnet_sa(key, in_channel, mlp, use_xyz=True):
    """Synthetic deterministic params for the Conv2d(1x1)+BatchNorm2d(+ReLU) stack."""
    last = in_channel + 3 if use_xyz else in_channel
    layers = []
    for out_c in mlp:
        key, kw, kb, kg, kbt, km, kv = jax.random.split(key, 7)
        layers.append({
            "w": jax.random.normal(kw, (last, out_c), jnp.float32) / math.sqrt(last),
            "b": 0.05 * jax.random.normal(kb, (out_c,), jnp.float32),
            "gamma": 1.0 + 0.1 * jax.random.normal(kg, (out_c,), jnp.float32),
            "beta": 0.1 * jax.random.normal(kbt, (out_c,), jnp.float32),
            "mean": 0.1 * jax.random.normal(km, (out_c,), jnp.float32),
            "var": 1.0 + 0.1 * jnp.abs(jax.random.normal(kv, (out_c,), jnp.float32)),
        })
        last = out_c
    return layers


def _fold_bn(params):
    """Fold eval-mode BatchNorm into the 1x1 conv: relu(((x@W + b) - mean)*g/sqrt(v+eps) + beta).
    TODO(synk): training-mode (batch-statistics) BatchNorm is not implemented; running stats only."""
    Ws, bs = [], []
    for layer in params:
        scale = layer["gamma"] * lax.rsqrt(layer["var"] + BN_EPS)
        Ws.append(layer["w"] * scale[None, :])
        bs.append((layer["b"] - layer["mean"]) * scale + layer["beta"])
    return Ws, bs


def _ref_mlp_maxpool(feats_bf, Ws_bf, biases):
    """Pure-XLA reference mirroring the kernel's bf16-operand / f32-accumulate numerics."""
    B, P, S, C = feats_bf.shape
    h = feats_bf.astype(jnp.float32).reshape(B, P * S, C)
    L = len(Ws_bf)
    for l, (w, b) in enumerate(zip(Ws_bf, biases)):
        h = jnp.maximum(jnp.dot(h, w.astype(jnp.float32)) + b[None, None, :], 0.0)
        if l + 1 < L:
            h = h.astype(jnp.bfloat16).astype(jnp.float32)
    return h.reshape(B, P, S, -1).max(axis=2)


def pointnet_sa_forward(params, xyz, points, *, npoint, nsample, radius,
                        group_all=False, use_xyz=True, use_pallas=True):
    """xyz: (B, 3, N), points: (B, f, N) or None
       -> (new_xyz: (B, 3, npoint), new_points: (B, mlp[-1], npoint))"""
    B, _, N = xyz.shape
    xyz_t = jnp.transpose(xyz, (0, 2, 1))                                    # (B, N, 3)
    pts_t = None if points is None else jnp.transpose(points, (0, 2, 1))     # (B, N, f)

    if group_all:
        # sample_and_group_all
        new_xyz = jnp.zeros((B, 3, 1), xyz.dtype)
        if points is not None:
            tok = jnp.concatenate([xyz_t, pts_t], axis=-1) if use_xyz else pts_t
        else:
            tok = xyz_t
        feats = tok[:, None, :, :]                                           # (B, 1, N, C)
    else:
        # sample_and_group (point-major grouping: neighbours of a point are contiguous)
        fps_idx = furthest_point_sample(xyz_t, npoint)                       # (B, npoint)
        new_xyz_t = _batched_gather(xyz_t, fps_idx)                          # (B, npoint, 3)
        new_xyz = jnp.transpose(new_xyz_t, (0, 2, 1))                        # (B, 3, npoint)
        idx = ball_query(radius, nsample, xyz_t, new_xyz_t)                  # (B, npoint, nsample)
        grouped_xyz = _batched_gather(xyz_t, idx) - new_xyz_t[:, :, None, :]  # (B, np, ns, 3)
        if points is not None:
            grouped_pts = _batched_gather(pts_t, idx)                        # (B, np, ns, f)
            feats = (jnp.concatenate([grouped_xyz, grouped_pts], axis=-1)
                     if use_xyz else grouped_pts)
        else:
            feats = grouped_xyz

    C_in = feats.shape[-1]
    C_pad = _round_up(C_in, 32)          # clean K layout for the first matmul (zeros are free)

    Ws, bs = _fold_bn(params)
    if C_pad > C_in:
        feats = jnp.pad(feats, ((0, 0), (0, 0), (0, 0), (0, C_pad - C_in)))
        Ws[0] = jnp.pad(Ws[0], ((0, C_pad - C_in), (0, 0)))

    # bf16 MXU operands (halves HBM traffic of the grouped tensor); accumulate/bias/ReLU/max in f32.
    feats_bf = feats.astype(jnp.bfloat16)
    Ws_bf = [w.astype(jnp.bfloat16) for w in Ws]

    if use_pallas:
        pooled = pallas_mlp_maxpool(feats_bf, Ws_bf, bs, out_dtype=xyz.dtype)   # (B, np, C_out)
    else:
        pooled = _ref_mlp_maxpool(feats_bf, Ws_bf, bs).astype(xyz.dtype)

    # TODO(synk): stacked SA modules could stay channel-last to avoid this transpose round-trip;
    # kept here to match the PyTorch (B, C, npoint) output contract.
    new_points = jnp.transpose(pooled, (0, 2, 1))                            # (B, C_out, npoint)
    return new_xyz, new_points


# ----------------------------- main -----------------------------

if __name__ == "__main__":
    B, N, f = 2, 64, 16
    npoint, nsample, radius = 16, 16, 0.3
    mlp = [64, 128]     # final channel = 128 -> lane-dense output stores

    key = jax.random.PRNGKey(0)
    k_xyz, k_pts, k_par = jax.random.split(key, 3)
    xyz = jax.random.uniform(k_xyz, (B, 3, N), jnp.float32)       # unit-cube point cloud
    points = jax.random.normal(k_pts, (B, f, N), jnp.float32)     # per-point features
    params = init_pointnet_sa(k_par, in_channel=f, mlp=mlp, use_xyz=True)

    fwd = jax.jit(functools.partial(pointnet_sa_forward, npoint=npoint, nsample=nsample,
                                    radius=radius, group_all=False, use_xyz=True))
    new_xyz, new_points = fwd(params, xyz, points)
    jax.block_until_ready((new_xyz, new_points))

    assert new_xyz.shape == (B, 3, npoint), new_xyz.shape
    assert new_points.shape == (B, mlp[-1], npoint), new_points.shape
    assert new_points.dtype == jnp.float32
    assert bool(jnp.all(jnp.isfinite(new_xyz)))
    assert bool(jnp.all(jnp.isfinite(new_points)))

    # Kernel-vs-XLA reference check (same bf16-operand / f32-accumulate numerics).
    ref_fwd = jax.jit(functools.partial(pointnet_sa_forward, npoint=npoint, nsample=nsample,
                                        radius=radius, group_all=False, use_xyz=True,
                                        use_pallas=False))
    _, ref_points = ref_fwd(params, xyz, points)
    jax.block_until_ready(ref_points)
    max_err = float(jnp.max(jnp.abs(new_points - ref_points)))
    assert bool(jnp.allclose(new_points, ref_points, rtol=5e-2, atol=5e-2)), max_err

    # group_all=True path (sample_and_group_all) through the same fused kernel.
    fwd_all = jax.jit(functools.partial(pointnet_sa_forward, npoint=1, nsample=N,
                                        radius=radius, group_all=True, use_xyz=True))
    gxyz, gpts = fwd_all(params, xyz, points)
    jax.block_until_ready((gxyz, gpts))
    assert gxyz.shape == (B, 3, 1) and gpts.shape == (B, mlp[-1], 1)
    assert bool(jnp.all(jnp.isfinite(gpts)))

    print("KERNEL_OK")
</pallas_src>

<mosaic_0001>
module attributes {stable_mosaic.version = 11 : i64} {
  func.func @_mlp_maxpool_kernel(%arg0: i32, %arg1: i32, %arg2: memref<1x16x16x32xbf16, #tpu.memory_space<vmem>>, %arg3: memref<32x64xbf16, #tpu.memory_space<vmem>>, %arg4: memref<1x64xf32, #tpu.memory_space<vmem>>, %arg5: memref<64x128xbf16, #tpu.memory_space<vmem>>, %arg6: memref<1x128xf32, #tpu.memory_space<vmem>>, %arg7: memref<1x16x128xf32, #tpu.memory_space<vmem>>) attributes {dimension_semantics = [#tpu.dimension_semantics<parallel>, #tpu.dimension_semantics<parallel>], iteration_bounds = array<i64: 2, 1>, scalar_prefetch = 0 : i64, scratch_operands = 0 : i64, tpu.core_type = #tpu.core_type<tc>, window_params = [{transform_indices = @transform_0, window_bounds = array<i64: 1, 16, 16, 32>}, {pipeline_mode = #tpu.pipeline_mode<synchronous>, transform_indices = @transform_1, window_bounds = array<i64: 32, 64>}, {pipeline_mode = #tpu.pipeline_mode<synchronous>, transform_indices = @transform_2, window_bounds = array<i64: 1, 64>}, {pipeline_mode = #tpu.pipeline_mode<synchronous>, transform_indices = @transform_3, window_bounds = array<i64: 64, 128>}, {pipeline_mode = #tpu.pipeline_mode<synchronous>, transform_indices = @transform_4, window_bounds = array<i64: 1, 128>}, {transform_indices = @transform_5, window_bounds = array<i64: 1, 16, 128>}]} {
    %c0 = arith.constant 0 : index
    %c0_0 = arith.constant 0 : index
    %c0_1 = arith.constant 0 : index
    %c0_2 = arith.constant 0 : index
    %0 = vector.load %arg2[%c0, %c0_0, %c0_1, %c0_2] : memref<1x16x16x32xbf16, #tpu.memory_space<vmem>>, vector<1x16x16x32xbf16>
    %1 = vector.shape_cast %0 : vector<1x16x16x32xbf16> to vector<16x16x32xbf16>
    %2 = vector.shape_cast %1 : vector<16x16x32xbf16> to vector<256x32xbf16>
    %c0_3 = arith.constant 0 : index
    %c0_4 = arith.constant 0 : index
    %3 = vector.load %arg3[%c0_3, %c0_4] : memref<32x64xbf16, #tpu.memory_space<vmem>>, vector<32x64xbf16>
    %c0_5 = arith.constant 0 : index
    %c0_6 = arith.constant 0 : index
    %4 = vector.load %arg4[%c0_5, %c0_6] : memref<1x64xf32, #tpu.memory_space<vmem>>, vector<1x64xf32>
    %cst = arith.constant dense<0.000000e+00> : vector<256x64xf32>
    %5 = tpu.matmul %2, %3, %cst {dimension_numbers = #tpu.dot_dimension_numbers<[1], [0], [0], [1], [0, 0, 1, 1], [], []>} : vector<256x32xbf16>, vector<32x64xbf16>, vector<256x64xf32> -> vector<256x64xf32>
    %6 = vector.broadcast %4 : vector<1x64xf32> to vector<256x64xf32>
    %7 = arith.addf %5, %6 : vector<256x64xf32>
    %cst_7 = arith.constant 0.000000e+00 : f32
    %8 = vector.broadcast %cst_7 : f32 to vector<256x64xf32>
    %9 = arith.maximumf %7, %8 : vector<256x64xf32>
    %10 = arith.truncf %9 : vector<256x64xf32> to vector<256x64xbf16>
    %c0_8 = arith.constant 0 : index
    %c0_9 = arith.constant 0 : index
    %11 = vector.load %arg5[%c0_8, %c0_9] : memref<64x128xbf16, #tpu.memory_space<vmem>>, vector<64x128xbf16>
    %c0_10 = arith.constant 0 : index
    %c0_11 = arith.constant 0 : index
    %12 = vector.load %arg6[%c0_10, %c0_11] : memref<1x128xf32, #tpu.memory_space<vmem>>, vector<1x128xf32>
    %cst_12 = arith.constant dense<0.000000e+00> : vector<256x128xf32>
    %13 = tpu.matmul %10, %11, %cst_12 {dimension_numbers = #tpu.dot_dimension_numbers<[1], [0], [0], [1], [0, 0, 1, 1], [], []>} : vector<256x64xbf16>, vector<64x128xbf16>, vector<256x128xf32> -> vector<256x128xf32>
    %14 = vector.broadcast %12 : vector<1x128xf32> to vector<256x128xf32>
    %15 = arith.addf %13, %14 : vector<256x128xf32>
    %cst_13 = arith.constant 0.000000e+00 : f32
    %16 = vector.broadcast %cst_13 : f32 to vector<256x128xf32>
    %17 = arith.maximumf %15, %16 : vector<256x128xf32>
    %18 = vector.shape_cast %17 : vector<256x128xf32> to vector<16x16x128xf32>
    %cst_14 = arith.constant dense<0xFF800000> : vector<16x128xf32>
    %19 = vector.multi_reduction <maximumf>, %18, %cst_14 [1] : vector<16x16x128xf32> to vector<16x128xf32>
    %c0_15 = arith.constant 0 : index
    %c0_16 = arith.constant 0 : index
    %c0_17 = arith.constant 0 : index
    %20 = vector.load %arg7[%c0_15, %c0_16, %c0_17] : memref<1x16x128xf32, #tpu.memory_space<vmem>>, vector<1x16x128xf32>
    %21 = vector.shape_cast %20 : vector<1x16x128xf32> to vector<16x128xf32>
    %22 = vector.shape_cast %19 : vector<16x128xf32> to vector<1x16x128xf32>
    tpu.vector_store %arg7[%c0_15, %c0_16, %c0_17], %22 {strides = array<i32>} : memref<1x16x128xf32, #tpu.memory_space<vmem>>, vector<1x16x128xf32>,
    return
  }
  func.func @transform_0(%arg0: i32, %arg1: i32) -> (i32, i32, i32, i32) {
    %c0_i32 = arith.constant 0 : i32
    %c0_i32_0 = arith.constant 0 : i32
    %c0_i32_1 = arith.constant 0 : i32
    return %arg0, %arg1, %c0_i32, %c0_i32_0 : i32, i32, i32, i32
  }
  func.func @transform_1(%arg0: i32, %arg1: i32) -> (i32, i32) {
    %c0_i32 = arith.constant 0 : i32
    %c0_i32_0 = arith.constant 0 : i32
    %c0_i32_1 = arith.constant 0 : i32
    return %c0_i32, %c0_i32_0 : i32, i32
  }
  func.func @transform_2(%arg0: i32, %arg1: i32) -> (i32, i32) {
    %c0_i32 = arith.constant 0 : i32
    %c0_i32_0 = arith.constant 0 : i32
    %c0_i32_1 = arith.constant 0 : i32
    return %c0_i32, %c0_i32_0 : i32, i32
  }
  func.func @transform_3(%arg0: i32, %arg1: i32) -> (i32, i32) {
    %c0_i32 = arith.constant 0 : i32
    %c0_i32_0 = arith.constant 0 : i32
    %c0_i32_1 = arith.constant 0 : i32
    return %c0_i32, %c0_i32_0 : i32, i32
  }
  func.func @transform_4(%arg0: i32, %arg1: i32) -> (i32, i32) {
    %c0_i32 = arith.constant 0 : i32
    %c0_i32_0 = arith.constant 0 : i32
    %c0_i32_1 = arith.constant 0 : i32
    return %c0_i32, %c0_i32_0 : i32, i32
  }
  func.func @transform_5(%arg0: i32, %arg1: i32) -> (i32, i32, i32) {
    %c0_i32 = arith.constant 0 : i32
    %c0_i32_0 = arith.constant 0 : i32
    return %arg0, %arg1, %c0_i32 : i32, i32, i32
  }
}

</mosaic_0001>

<llo_original>
// kernel: custom-call.8
$region0: #{custom-call.8}
  %s0 = inlined_call_operand.vmem [shape: f32[2,64], index: 0, kind: output, shape index: {}]

// kernel: pointnet_sa_forward.1
$region0: #{pointnet_sa_forward.1}
  #allocation0 [shape = 'u32[]', space=smem, size = 0x4, offset = 0x4, fixed_abs, tag = 'smem constant byte address 0x4 - core index']
  #allocation1 [shape = 'u32[72,128]{1,0:T(1,128)}', space=vmem, size = 0x9000, scoped, tag = 'internal scratch']
  %s0 = inlined_call_operand.vmem [shape: bf16[2,16,16,32], index: 0, kind: input, shape index: {}]
  %s1 = inlined_call_operand.vmem [shape: bf16[32,64], index: 1, kind: input, shape index: {}]
  %s2 = inlined_call_operand.vmem [shape: f32[1,64], index: 2, kind: input, shape index: {}]
  %s3 = inlined_call_operand.vmem [shape: bf16[64,128], index: 3, kind: input, shape index: {}]
  %s4 = inlined_call_operand.vmem [shape: f32[1,128], index: 4, kind: input, shape index: {}]
  %s5 = inlined_call_operand.hbm [shape: f32[2,16,128], index: 5, kind: output, shape index: {}]
  %s6 = sld [smem:[#allocation0]]
  $region53: #{pointnet_sa_forward.1} parent=0
    _
  %s8 = ssub.s32 1, %s6
  %s9 = scalar_select 0, %s8, %s6
  $region1: #{pointnet_sa_forward.1} parent=0
    #allocation2 [shape = 'u8[16384]{0}', space=vmem, size = 0x4000, scoped, tag = 'output window, operand 0']
    #allocation3 [shape = 's32[2]{0}', space=sflag, size = 0x8, scoped, tag = 'scoped memory for pointnet_sa_forward.1']
    %10 = vsyncpa [#allocation3], 0
    %s11 = scalar_lea.sflag [#allocation3], 1
    %12 = vsyncpa %s11, 0
    loop: start=0, step=1, limit=4
    $region2: #{pointnet_sa_forward.1} parent=1 // loop_pre_header
      _
    $region3: #{pointnet_sa_forward.1} parent=1 // loop_header
      %s14 = sphi 0, %s18
      %p15 = scmp.ge.s32.totalorder %s14, 4
      %s21 = sphi 0, %s33
      %s22 = sphi 0, %s29
      %s23 = sphi 0, %s21
      %s24 = sphi 0, %s22
      %s25 = sphi 0, %s23
      %s26 = sphi 0, %s24
      %s38 = sphi 0, %s40
      %s41 = sphi 0, %s38
      %s42 = sphi 0, %s41
      %s58 = sphi 0, %s42
      %s62 = sphi 0, %s62
      %s64 = sphi 0, %s62
      %s65 = sphi 0, %s64
      %s79 = sphi 0, %s65
      %s83 = sphi 0, %s83
      %s85 = sphi 0, %s83
      %s86 = sphi 0, %s85
      %s100 = sphi 0, %s86
      %s104 = sphi 0, %s104
      %s106 = sphi 0, %s104
      %s107 = sphi 0, %s106
      %s121 = sphi 0, %s107
      %s125 = sphi 0, %s125
      %s127 = sphi 0, %s125
      %s128 = sphi 0, %s127
      %s142 = sphi 0, %s128
      %s150 = sphi 0, %s152
      %s153 = sphi 0, %s150
      %s154 = sphi 0, %s153
      %s170 = sphi 0, %s154
    $region4: #{pointnet_sa_forward.1} parent=1 // loop_header_branch
      %17 = sbr.rel (%p15) target = $region8
    $region5: #{pointnet_sa_forward.1} parent=1 // loop_body
      %s19 = ssub.s32 %s14, 1
      %s20 = ssub.s32 %s14, 2
      %s27 = sadd.s32 1, %s22
      %p28 = scmp.ge.s32.totalorder %s27, 1
      %s29 = scalar_select %p28, 0, %s27
      %s30 = sadd.s32 1, %s21
      %s31 = scalar_select %p28, %s30, %s21
      %p32 = scmp.ge.s32.totalorder %s31, 2
      %s33 = scalar_select %p32, 0, %s31
      %s34 = ssub.s32 %s21, %s33
      %s35 = ssub.s32 %s22, %s29
      %s36 = sor.u32 %s34, %s35
      %p37 = scmp.eq.s32.totalorder %s36, 0
      %s39 = sadd.s32 %s38, 1
      %s40 = scalar_select %p37, %s38, %s39
      %p43 = pneg %p37
      %p44 = scmp.eq.s32.totalorder %s14, 1
      %p45 = por %p43, %p44
      %p46 = scmp.ne.s32.totalorder %s38, %s41
      %p47 = scmp.eq.s32.totalorder %s14, 0
      %p48 = por %p46, %p47
      %p49 = scmp.ne.s32.totalorder %s38, %s41
      %p50 = scmp.eq.s32.totalorder %s19, 1
      %p51 = por %p49, %p50
      %p52 = scmp.ne.s32.totalorder %s41, %s42
      %p53 = scmp.eq.s32.totalorder %s19, 0
      %p54 = por %p52, %p53
      %p55 = scmp.ne.s32.totalorder %s41, %s42
      %p56 = scmp.eq.s32.totalorder %s20, 1
      %p57 = por %p55, %p56
      %p59 = scmp.ne.s32.totalorder %s42, %s58
      %p60 = scmp.eq.s32.totalorder %s20, 0
      %p61 = por %p59, %p60
      %s63 = sadd.s32 %s62, 1
      %p66 = scmp.eq.s32.totalorder %s14, 1
      %p67 = scmp.ne.s32.totalorder %s62, %s64
      %p68 = scmp.eq.s32.totalorder %s14, 0
      %p69 = por %p67, %p68
      %p70 = scmp.ne.s32.totalorder %s62, %s64
      %p71 = scmp.eq.s32.totalorder %s19, 1
      %p72 = por %p70, %p71
      %p73 = scmp.ne.s32.totalorder %s64, %s65
      %p74 = scmp.eq.s32.totalorder %s19, 0
      %p75 = por %p73, %p74
      %p76 = scmp.ne.s32.totalorder %s64, %s65
      %p77 = scmp.eq.s32.totalorder %s20, 1
      %p78 = por %p76, %p77
      %p80 = scmp.ne.s32.totalorder %s65, %s79
      %p81 = scmp.eq.s32.totalorder %s20, 0
      %p82 = por %p80, %p81
      %s84 = sadd.s32 %s83, 1
      %p87 = scmp.eq.s32.totalorder %s14, 1
      %p88 = scmp.ne.s32.totalorder %s83, %s85
      %p89 = scmp.eq.s32.totalorder %s14, 0
      %p90 = por %p88, %p89
      %p91 = scmp.ne.s32.totalorder %s83, %s85
      %p92 = scmp.eq.s32.totalorder %s19, 1
      %p93 = por %p91, %p92
      %p94 = scmp.ne.s32.totalorder %s85, %s86
      %p95 = scmp.eq.s32.totalorder %s19, 0
      %p96 = por %p94, %p95
      %p97 = scmp.ne.s32.totalorder %s85, %s86
      %p98 = scmp.eq.s32.totalorder %s20, 1
      %p99 = por %p97, %p98
      %p101 = scmp.ne.s32.totalorder %s86, %s100
      %p102 = scmp.eq.s32.totalorder %s20, 0
      %p103 = por %p101, %p102
      %s105 = sadd.s32 %s104, 1
      %p108 = scmp.eq.s32.totalorder %s14, 1
      %p109 = scmp.ne.s32.totalorder %s104, %s106
      %p110 = scmp.eq.s32.totalorder %s14, 0
      %p111 = por %p109, %p110
      %p112 = scmp.ne.s32.totalorder %s104, %s106
      %p113 = scmp.eq.s32.totalorder %s19, 1
      %p114 = por %p112, %p113
      %p115 = scmp.ne.s32.totalorder %s106, %s107
      %p116 = scmp.eq.s32.totalorder %s19, 0
      %p117 = por %p115, %p116
      %p118 = scmp.ne.s32.totalorder %s106, %s107
      %p119 = scmp.eq.s32.totalorder %s20, 1
      %p120 = por %p118, %p119
      %p122 = scmp.ne.s32.totalorder %s107, %s121
      %p123 = scmp.eq.s32.totalorder %s20, 0
      %p124 = por %p122, %p123
      %s126 = sadd.s32 %s125, 1
      %p129 = scmp.eq.s32.totalorder %s14, 1
      %p130 = scmp.ne.s32.totalorder %s125, %s127
      %p131 = scmp.eq.s32.totalorder %s14, 0
      %p132 = por %p130, %p131
      %p133 = scmp.ne.s32.totalorder %s125, %s127
      %p134 = scmp.eq.s32.totalorder %s19, 1
      %p135 = por %p133, %p134
      %p136 = scmp.ne.s32.totalorder %s127, %s128
      %p137 = scmp.eq.s32.totalorder %s19, 0
      %p138 = por %p136, %p137
      %p139 = scmp.ne.s32.totalorder %s127, %s128
      %p140 = scmp.eq.s32.totalorder %s20, 1
      %p141 = por %p139, %p140
      %p143 = scmp.ne.s32.totalorder %s128, %s142
      %p144 = scmp.eq.s32.totalorder %s20, 0
      %p145 = por %p143, %p144
      %s146 = ssub.s32 %s21, %s33
      %s147 = ssub.s32 %s22, %s29
      %s148 = sor.u32 %s146, %s147
      %p149 = scmp.eq.s32.totalorder %s148, 0
      %s151 = sadd.s32 %s150, 1
      %s152 = scalar_select %p149, %s150, %s151
      %p155 = pneg %p149
      %p156 = scmp.eq.s32.totalorder %s14, 1
      %p157 = por %p155, %p156
      %p158 = scmp.ne.s32.totalorder %s150, %s153
      %p159 = scmp.eq.s32.totalorder %s14, 0
      %p160 = por %p158, %p159
      %p161 = scmp.ne.s32.totalorder %s150, %s153
      %p162 = scmp.eq.s32.totalorder %s19, 1
      %p163 = por %p161, %p162
      %p164 = scmp.ne.s32.totalorder %s153, %s154
      %p165 = scmp.eq.s32.totalorder %s19, 0
      %p166 = por %p164, %p165
      %p167 = scmp.ne.s32.totalorder %s153, %s154
      %p168 = scmp.eq.s32.totalorder %s20, 1
      %p169 = por %p167, %p168
      %p171 = scmp.ne.s32.totalorder %s154, %s170
      %p172 = scmp.eq.s32.totalorder %s20, 0
      %p173 = por %p171, %p172
      %p174 = scmp.le.s32.totalorder 1, %s14
      %p175 = scmp.lt.s32.totalorder %s14, 3
      %p176 = pnand %p174, %p175
      %p177 = pneg %p176
      // Predicated region
      $region9: #{pointnet_sa_forward.1} parent=5 // pred_check
        _
      $region10: #{pointnet_sa_forward.1} parent=5 // pred_check_branch
        %179 = sbr.rel (%p176) target = $region12
      $region11: #{pointnet_sa_forward.1} parent=5 // pred_region
        %s180 = ssub.s32 %s14, 1
        // Predicated region
        $region13: #{pointnet_sa_forward.1} parent=11 // pred_check
          %p181 = pneg %p75
        $region14: #{pointnet_sa_forward.1} parent=11 // pred_check_branch
          %183 = sbr.rel (%p181) target = $region16
        $region15: #{pointnet_sa_forward.1} parent=11 // pred_region
          _
        $region16: #{pointnet_sa_forward.1} parent=11 // pred_fallthru
          _
        // Predicated region
        $region17: #{pointnet_sa_forward.1} parent=11 // pred_check
          %p184 = pneg %p96
        $region18: #{pointnet_sa_forward.1} parent=11 // pred_check_branch
          %186 = sbr.rel (%p184) target = $region20
        $region19: #{pointnet_sa_forward.1} parent=11 // pred_region
          _
        $region20: #{pointnet_sa_forward.1} parent=11 // pred_fallthru
          _
        // Predicated region
        $region21: #{pointnet_sa_forward.1} parent=11 // pred_check
          %p187 = pneg %p117
        $region22: #{pointnet_sa_forward.1} parent=11 // pred_check_branch
          %189 = sbr.rel (%p187) target = $region24
        $region23: #{pointnet_sa_forward.1} parent=11 // pred_region
          _
        $region24: #{pointnet_sa_forward.1} parent=11 // pred_fallthru
          _
        // Predicated region
        $region25: #{pointnet_sa_forward.1} parent=11 // pred_check
          %p190 = pneg %p138
        $region26: #{pointnet_sa_forward.1} parent=11 // pred_check_branch
          %192 = sbr.rel (%p190) target = $region28
        $region27: #{pointnet_sa_forward.1} parent=11 // pred_region
          _
        $region28: #{pointnet_sa_forward.1} parent=11 // pred_fallthru
          _
      $region12: #{pointnet_sa_forward.1} parent=5 // pred_fallthru
        _
      %p193 = scmp.lt.s32.totalorder %s14, 2
      // Predicated region
      $region29: #{pointnet_sa_forward.1} parent=5 // pred_check
        %p194 = pneg %p193
      $region30: #{pointnet_sa_forward.1} parent=5 // pred_check_branch
        %196 = sbr.rel (%p194) target = $region32
      $region31: #{pointnet_sa_forward.1} parent=5 // pred_region
        // Predicated region
        $region33: #{pointnet_sa_forward.1} parent=31 // pred_check
          %p197 = pneg %p48
        $region34: #{pointnet_sa_forward.1} parent=31 // pred_check_branch
          %199 = sbr.rel (%p197) target = $region36
        $region35: #{pointnet_sa_forward.1} parent=31 // pred_region
          %s200 = smul.u32 16, %s22
          %p201 = scmp.lt.s32.totalorder %s21, 1
          %s202 = scalar_select %p201, %s21, 1
          %p203 = scmp.lt.s32.totalorder %s200, 15
          %s204 = scalar_select %p203, %s200, 15
          %s205 = smul.addr %s204, 2
          %s206 = smul.addr %s202, 32
          %s207 = sadd.s32 %s205, %s206
          %s208 = smul.addr %s207, 4
          %s209 = scalar_lea.vmem %s0, %s208
          %s210 = smul.u32 16, %s22
        $region36: #{pointnet_sa_forward.1} parent=31 // pred_fallthru
          _
      $region32: #{pointnet_sa_forward.1} parent=5 // pred_fallthru
        _
      %p211 = scmp.le.s32.totalorder 1, %s14
      %p212 = scmp.lt.s32.totalorder %s14, 3
      %p213 = pnand %p211, %p212
      %p214 = pneg %p213
      // Predicated region
      $region37: #{pointnet_sa_forward.1} parent=5 // pred_check
        _
      $region38: #{pointnet_sa_forward.1} parent=5 // pred_check_branch
        %216 = sbr.rel (%p213) target = $region40
      $region39: #{pointnet_sa_forward.1} parent=5 // pred_region
        %s217 = ssub.s32 %s14, 1
        %s218 = smul.u32 16, %s24
        %p219 = scmp.lt.s32.totalorder %s23, 1
        %s220 = scalar_select %p219, %s23, 1
        %p221 = scmp.lt.s32.totalorder %s218, 15
        %s222 = scalar_select %p221, %s218, 15
        %s223 = smul.addr %s222, 2
        %s224 = smul.addr %s220, 32
        %s225 = sadd.s32 %s223, %s224
        %s226 = smul.addr %s225, 4
        %s227 = scalar_lea.vmem %s0, %s226
        %p228 = pneg %p54
        %p229 = pneg %p51
        %p230 = pneg %p75
        %p231 = pneg %p72
        %p232 = pneg %p96
        %p233 = pneg %p93
        %p234 = pneg %p117
        %p235 = pneg %p114
        %p236 = pneg %p138
        %p237 = pneg %p135
        %p238 = pneg %p166
        %p239 = pneg %p163
        %s240 = sand.u32 %s153, 1
        %s241 = scalar_lea.sflag [#allocation3], %s240
        %s242 = sand.u32 %s153, 1
        %s243 = smul.addr %s242, 16
        %s244 = scalar_lea.vmem [#allocation2], %s243
        %s245 = smul.u32 16, %s24
        %p246 = scmp.lt.s32.totalorder %s23, 1
        %s247 = scalar_select %p246, %s23, 1
        %p248 = scmp.lt.s32.totalorder %s245, 15
        %s249 = scalar_select %p248, %s245, 15
        %s250 = smul.addr %s249, 2
        %s251 = smul.addr %s247, 32
        %s252 = sadd.s32 %s250, %s251
        %s253 = smul.addr %s252, 4
        %s254 = scalar_lea.vmem %s0, %s253
        %s255 = smul.u32 16, %s24
        %s256 = smul.u32 2, %s24
        %v258 = vld [vmem:[%s254] sm:$0xf]
        %v259 = vld [vmem:[%s254 + $0x4] sm:$0xf]
        %v260 = vld [vmem:[%s254 + $0x8] sm:$0xf]
        %v261 = vld [vmem:[%s254 + $0xc] sm:$0xf]
        %v262 = vld [vmem:[%s254 + $0x10] sm:$0xf]
        %v263 = vld [vmem:[%s254 + $0x14] sm:$0xf]
        %v264 = vld [vmem:[%s254 + $0x18] sm:$0xf]
        %v265 = vld [vmem:[%s254 + $0x1c] sm:$0xf]
        %v266 = vld [vmem:[%s254 + $0x20] sm:$0xf]
        %v267 = vld [vmem:[%s254 + $0x24] sm:$0xf]
        %v268 = vld [vmem:[%s254 + $0x28] sm:$0xf]
        %v269 = vld [vmem:[%s254 + $0x2c] sm:$0xf]
        %v270 = vld [vmem:[%s254 + $0x30] sm:$0xf]
        %v271 = vld [vmem:[%s254 + $0x34] sm:$0xf]
        %v272 = vld [vmem:[%s254 + $0x38] sm:$0xf]
        %v273 = vld [vmem:[%s254 + $0x3c] sm:$0xf]
        %v274 = vld [vmem:[%s254 + $0x40] sm:$0xf]
        %v275 = vld [vmem:[%s254 + $0x44] sm:$0xf]
        %v276 = vld [vmem:[%s254 + $0x48] sm:$0xf]
        %v277 = vld [vmem:[%s254 + $0x4c] sm:$0xf]
        %v278 = vld [vmem:[%s254 + $0x50] sm:$0xf]
        %v279 = vld [vmem:[%s254 + $0x54] sm:$0xf]
        %v280 = vld [vmem:[%s254 + $0x58] sm:$0xf]
        %v281 = vld [vmem:[%s254 + $0x5c] sm:$0xf]
        %v282 = vld [vmem:[%s254 + $0x60] sm:$0xf]
        %v283 = vld [vmem:[%s254 + $0x64] sm:$0xf]
        %v284 = vld [vmem:[%s254 + $0x68] sm:$0xf]
        %v285 = vld [vmem:[%s254 + $0x6c] sm:$0xf]
        %v286 = vld [vmem:[%s254 + $0x70] sm:$0xf]
        %v287 = vld [vmem:[%s254 + $0x74] sm:$0xf]
        %v288 = vld [vmem:[%s254 + $0x78] sm:$0xf]
        %v289 = vld [vmem:[%s254 + $0x7c] sm:$0xf]
        %v290 = vld [vmem:[%s1] sm:$0xf]
        %v291 = vld [vmem:[%s1 + $0x4] sm:$0xf]
        %v292 = vld [vmem:[%s1 + $0x8] sm:$0xf]
        %v293 = vld [vmem:[%s1 + $0xc] sm:$0xf]
        %v294 = vld [vmem:[%s2] sm:$0x1]
        %v296 = vperm.slane %v294, 0
        %v330 = vunpack.c.l.b16 %v258
        %v331 = vunpack.c.l.b16 %v259
        %v332 = vunpack.c.l.b16 %v260
        %v333 = vunpack.c.l.b16 %v261
        %v334 = vunpack.c.l.b16 %v262
        %v335 = vunpack.c.l.b16 %v263
        %v336 = vunpack.c.l.b16 %v264
        %v337 = vunpack.c.l.b16 %v265
        %v338 = vunpack.c.l.b16 %v266
        %v339 = vunpack.c.l.b16 %v267
        %v340 = vunpack.c.l.b16 %v268
        %v341 = vunpack.c.l.b16 %v269
        %v342 = vunpack.c.l.b16 %v270
        %v343 = vunpack.c.l.b16 %v271
        %v344 = vunpack.c.l.b16 %v272
        %v345 = vunpack.c.l.b16 %v273
        %v346 = vunpack.c.l.b16 %v274
        %v347 = vunpack.c.l.b16 %v275
        %v348 = vunpack.c.l.b16 %v276
        %v349 = vunpack.c.l.b16 %v277
        %v350 = vunpack.c.l.b16 %v278
        %v351 = vunpack.c.l.b16 %v279
        %v352 = vunpack.c.l.b16 %v280
        %v353 = vunpack.c.l.b16 %v281
        %v354 = vunpack.c.l.b16 %v282
        %v355 = vunpack.c.l.b16 %v283
        %v356 = vunpack.c.l.b16 %v284
        %v357 = vunpack.c.l.b16 %v285
        %v358 = vunpack.c.l.b16 %v286
        %v359 = vunpack.c.l.b16 %v287
        %v360 = vunpack.c.l.b16 %v288
        %v361 = vunpack.c.l.b16 %v289
        %v362 = vpack.c.b16 %v331, %v330
        %v363 = vpack.c.b16 %v333, %v332
        %v364 = vpack.c.b16 %v335, %v334
        %v365 = vpack.c.b16 %v337, %v336
        %v366 = vpack.c.b16 %v339, %v338
        %v367 = vpack.c.b16 %v341, %v340
        %v368 = vpack.c.b16 %v343, %v342
        %v369 = vpack.c.b16 %v345, %v344
        %v370 = vpack.c.b16 %v347, %v346
        %v371 = vpack.c.b16 %v349, %v348
        %v372 = vpack.c.b16 %v351, %v350
        %v373 = vpack.c.b16 %v353, %v352
        %v374 = vpack.c.b16 %v355, %v354
        %v375 = vpack.c.b16 %v357, %v356
        %v376 = vpack.c.b16 %v359, %v358
        %v377 = vpack.c.b16 %v361, %v360
        %v382 = vunpack.c.l.b16 %v290
        %v383 = vunpack.c.l.b16 %v291
        %v384 = vunpack.c.l.b16 %v292
        %v385 = vunpack.c.l.b16 %v293
        %v386 = vpack.c.b16 %v383, %v382
        %v387 = vpack.c.b16 %v385, %v384
        %vm390 = vcmask 261120
        %v392 = vsel %vm390, %v362, 0
        %v395 = vsel %vm390, %v363, 0
        %v398 = vsel %vm390, %v364, 0
        %v401 = vsel %vm390, %v365, 0
        %v404 = vsel %vm390, %v366, 0
        %v407 = vsel %vm390, %v367, 0
        %v410 = vsel %vm390, %v368, 0
        %v413 = vsel %vm390, %v369, 0
        %v416 = vsel %vm390, %v370, 0
        %v419 = vsel %vm390, %v371, 0
        %v422 = vsel %vm390, %v372, 0
        %v425 = vsel %vm390, %v373, 0
        %v428 = vsel %vm390, %v374, 0
        %v431 = vsel %vm390, %v375, 0
        %v434 = vsel %vm390, %v376, 0
        %v437 = vsel %vm390, %v377, 0
        %439 = vmatpush.bf16.msra.mxu0 0
        %440 = vmatpush.bf16.msra.mxu0 0
        %441 = vmatpush.bf16.msra.mxu0 0
        %442 = vmatpush.bf16.msra.mxu0 0
        %443 = vmatpush.bf16.msra.mxu0 0
        %444 = vmatpush.bf16.msra.mxu0 0
        %445 = vmatpush.bf16.msra.mxu0 %v387
        %446 = vmatpush.bf16.msra.mxu0 %v386
        %447 = vmatmul.bf16.gmra.mxu0 %v392
        %v448 = vpop.f32.mrf.mxu0
        %v449 = vadd.f32 %v296, %v448
        %v450 = vpop.f32.mrf.mxu0
        %v451 = vadd.f32 %v296, %v450
        %452 = vmatmul.bf16.gmra.mxu0 %v395
        %v453 = vpop.f32.mrf.mxu0
        %v454 = vadd.f32 %v296, %v453
        %v455 = vpop.f32.mrf.mxu0
        %v456 = vadd.f32 %v296, %v455
        %457 = vmatmul.bf16.gmra.mxu0 %v398
        %v458 = vpop.f32.mrf.mxu0
        %v459 = vadd.f32 %v296, %v458
        %v460 = vpop.f32.mrf.mxu0
        %v461 = vadd.f32 %v296, %v460
        %462 = vmatmul.bf16.gmra.mxu0 %v401
        %v463 = vpop.f32.mrf.mxu0
        %v464 = vadd.f32 %v296, %v463
        %v465 = vpop.f32.mrf.mxu0
        %v466 = vadd.f32 %v296, %v465
        %467 = vmatmul.bf16.gmra.mxu0 %v404
        %v468 = vpop.f32.mrf.mxu0
        %v469 = vadd.f32 %v296, %v468
        %v470 = vpop.f32.mrf.mxu0
        %v471 = vadd.f32 %v296, %v470
        %472 = vmatmul.bf16.gmra.mxu0 %v407
        %v473 = vpop.f32.mrf.mxu0
        %v474 = vadd.f32 %v296, %v473
        %v475 = vpop.f32.mrf.mxu0
        %v476 = vadd.f32 %v296, %v475
        %477 = vmatmul.bf16.gmra.mxu0 %v410
        %v478 = vpop.f32.mrf.mxu0
        %v479 = vadd.f32 %v296, %v478
        %v480 = vpop.f32.mrf.mxu0
        %v481 = vadd.f32 %v296, %v480
        %482 = vmatmul.bf16.gmra.mxu0 %v413
        %v483 = vpop.f32.mrf.mxu0
        %v484 = vadd.f32 %v296, %v483
        %v485 = vpop.f32.mrf.mxu0
        %v486 = vadd.f32 %v296, %v485
        %487 = vmatmul.bf16.gmra.mxu0 %v416
        %v488 = vpop.f32.mrf.mxu0
        %v489 = vadd.f32 %v296, %v488
        %v490 = vpop.f32.mrf.mxu0
        %v491 = vadd.f32 %v296, %v490
        %492 = vmatmul.bf16.gmra.mxu0 %v419
        %v493 = vpop.f32.mrf.mxu0
        %v494 = vadd.f32 %v296, %v493
        %v495 = vpop.f32.mrf.mxu0
        %v496 = vadd.f32 %v296, %v495
        %497 = vmatmul.bf16.gmra.mxu0 %v422
        %v498 = vpop.f32.mrf.mxu0
        %v499 = vadd.f32 %v296, %v498
        %v500 = vpop.f32.mrf.mxu0
        %v501 = vadd.f32 %v296, %v500
        %502 = vmatmul.bf16.gmra.mxu0 %v425
        %v503 = vpop.f32.mrf.mxu0
        %v504 = vadd.f32 %v296, %v503
        %v505 = vpop.f32.mrf.mxu0
        %v506 = vadd.f32 %v296, %v505
        %507 = vmatmul.bf16.gmra.mxu0 %v428
        %v508 = vpop.f32.mrf.mxu0
        %v509 = vadd.f32 %v296, %v508
        %v510 = vpop.f32.mrf.mxu0
        %v511 = vadd.f32 %v296, %v510
        %512 = vmatmul.bf16.gmra.mxu0 %v431
        %v513 = vpop.f32.mrf.mxu0
        %v514 = vadd.f32 %v296, %v513
        %v515 = vpop.f32.mrf.mxu0
        %v516 = vadd.f32 %v296, %v515
        %517 = vmatmul.bf16.gmra.mxu0 %v434
        %v518 = vpop.f32.mrf.mxu0
        %v519 = vadd.f32 %v296, %v518
        %v520 = vpop.f32.mrf.mxu0
        %v521 = vadd.f32 %v296, %v520
        %522 = vmatmul.bf16.gmra.mxu0 %v437
        %v523 = vpop.f32.mrf.mxu0
        %v524 = vadd.f32 %v296, %v523
        %v525 = vpop.f32.mrf.mxu0
        %v526 = vadd.f32 %v296, %v525
        %527 = vdwg.mxu0
        %v528 = vmax.f32 %v449, 0.0
        %v529 = vmax.f32 %v451, 0.0
        %v530 = vmax.f32 %v454, 0.0
        %v531 = vmax.f32 %v456, 0.0
        %v532 = vmax.f32 %v459, 0.0
        %v533 = vmax.f32 %v461, 0.0
        %v534 = vmax.f32 %v464, 0.0
        %v535 = vmax.f32 %v466, 0.0
        %v536 = vmax.f32 %v469, 0.0
        %v537 = vmax.f32 %v471, 0.0
        %v538 = vmax.f32 %v474, 0.0
        %v539 = vmax.f32 %v476, 0.0
        %v540 = vmax.f32 %v479, 0.0
        %v541 = vmax.f32 %v481, 0.0
        %v542 = vmax.f32 %v484, 0.0
        %v543 = vmax.f32 %v486, 0.0
        %v544 = vmax.f32 %v489, 0.0
        %v545 = vmax.f32 %v491, 0.0
        %v546 = vmax.f32 %v494, 0.0
        %v547 = vmax.f32 %v496, 0.0
        %v548 = vmax.f32 %v499, 0.0
        %v549 = vmax.f32 %v501, 0.0
        %v550 = vmax.f32 %v504, 0.0
        %v551 = vmax.f32 %v506, 0.0
        %v552 = vmax.f32 %v509, 0.0
        %v553 = vmax.f32 %v511, 0.0
        %v554 = vmax.f32 %v514, 0.0
        %v555 = vmax.f32 %v516, 0.0
        %v556 = vmax.f32 %v519, 0.0
        %v557 = vmax.f32 %v521, 0.0
        %v558 = vmax.f32 %v524, 0.0
        %v559 = vmax.f32 %v526, 0.0
        %v560 = vpack.c.bf16 %v529, %v528
        %v561 = vpack.c.bf16 %v531, %v530
        %v562 = vpack.c.bf16 %v533, %v532
        %v563 = vpack.c.bf16 %v535, %v534
        %v564 = vpack.c.bf16 %v537, %v536
        %v565 = vpack.c.bf16 %v539, %v538
        %v566 = vpack.c.bf16 %v541, %v540
        %v567 = vpack.c.bf16 %v543, %v542
        %v568 = vpack.c.bf16 %v545, %v544
        %v569 = vpack.c.bf16 %v547, %v546
        %v570 = vpack.c.bf16 %v549, %v548
        %v571 = vpack.c.bf16 %v551, %v550
        %v572 = vpack.c.bf16 %v553, %v552
        %v573 = vpack.c.bf16 %v555, %v554
        %v574 = vpack.c.bf16 %v557, %v556
        %v575 = vpack.c.bf16 %v559, %v558
        %v576 = vld [vmem:[%s3] sm:$0xf]
        %v577 = vld [vmem:[%s3 + $0x4] sm:$0xf]
        %v578 = vld [vmem:[%s3 + $0x8] sm:$0xf]
        %v579 = vld [vmem:[%s3 + $0xc] sm:$0xf]
        %v580 = vld [vmem:[%s3 + $0x10] sm:$0xf]
        %v581 = vld [vmem:[%s3 + $0x14] sm:$0xf]
        %v582 = vld [vmem:[%s3 + $0x18] sm:$0xf]
        %v583 = vld [vmem:[%s3 + $0x1c] sm:$0xf]
        %v584 = vld [vmem:[%s4] sm:$0x1]
        %v586 = vperm.slane %v584, 0
        %v596 = vunpack.c.l.b16 %v576
        %v597 = vunpack.c.l.b16 %v577
        %v598 = vunpack.c.l.b16 %v578
        %v599 = vunpack.c.l.b16 %v579
        %v600 = vunpack.c.l.b16 %v580
        %v601 = vunpack.c.l.b16 %v581
        %v602 = vunpack.c.l.b16 %v582
        %v603 = vunpack.c.l.b16 %v583
        %v604 = vpack.c.b16 %v597, %v596
        %v605 = vpack.c.b16 %v599, %v598
        %v606 = vpack.c.b16 %v601, %v600
        %v607 = vpack.c.b16 %v603, %v602
        %vm612 = vcmask 523264
        %v614 = vsel %vm612, %v560, 0
        %v617 = vsel %vm612, %v561, 0
        %v620 = vsel %vm612, %v562, 0
        %v623 = vsel %vm612, %v563, 0
        %v626 = vsel %vm612, %v564, 0
        %v629 = vsel %vm612, %v565, 0
        %v632 = vsel %vm612, %v566, 0
        %v635 = vsel %vm612, %v567, 0
        %v638 = vsel %vm612, %v568, 0
        %v641 = vsel %vm612, %v569, 0
        %v644 = vsel %vm612, %v570, 0
        %v647 = vsel %vm612, %v571, 0
        %v650 = vsel %vm612, %v572, 0
        %v653 = vsel %vm612, %v573, 0
        %v656 = vsel %vm612, %v574, 0
        %v659 = vsel %vm612, %v575, 0
        %661 = vmatpush.bf16.msra.mxu0 0
        %662 = vmatpush.bf16.msra.mxu0 0
        %663 = vmatpush.bf16.msra.mxu0 0
        %664 = vmatpush.bf16.msra.mxu0 0
        %665 = vmatpush.bf16.msra.mxu0 %v607
        %666 = vmatpush.bf16.msra.mxu0 %v606
        %667 = vmatpush.bf16.msra.mxu0 %v605
        %668 = vmatpush.bf16.msra.mxu0 %v604
        %669 = vmatmul.bf16.gmra.mxu0 %v614
        %v670 = vpop.f32.mrf.mxu0
        %v671 = vadd.f32 %v586, %v670
        %v672 = vpop.f32.mrf.mxu0
        %v673 = vadd.f32 %v586, %v672
        %674 = vmatmul.bf16.gmra.mxu0 %v617
        %v675 = vpop.f32.mrf.mxu0
        %v676 = vadd.f32 %v586, %v675
        %v677 = vpop.f32.mrf.mxu0
        %v678 = vadd.f32 %v586, %v677
        %679 = vmatmul.bf16.gmra.mxu0 %v620
        %v680 = vpop.f32.mrf.mxu0
        %v681 = vadd.f32 %v586, %v680
        %v682 = vpop.f32.mrf.mxu0
        %v683 = vadd.f32 %v586, %v682
        %684 = vmatmul.bf16.gmra.mxu0 %v623
        %v685 = vpop.f32.mrf.mxu0
        %v686 = vadd.f32 %v586, %v685
        %v687 = vpop.f32.mrf.mxu0
        %v688 = vadd.f32 %v586, %v687
        %689 = vmatmul.bf16.gmra.mxu0 %v626
        %v690 = vpop.f32.mrf.mxu0
        %v691 = vadd.f32 %v586, %v690
        %v692 = vpop.f32.mrf.mxu0
        %v693 = vadd.f32 %v586, %v692
        %694 = vmatmul.bf16.gmra.mxu0 %v629
        %v695 = vpop.f32.mrf.mxu0
        %v696 = vadd.f32 %v586, %v695
        %v697 = vpop.f32.mrf.mxu0
        %v698 = vadd.f32 %v586, %v697
        %699 = vmatmul.bf16.gmra.mxu0 %v632
        %v700 = vpop.f32.mrf.mxu0
        %v701 = vadd.f32 %v586, %v700
        %v702 = vpop.f32.mrf.mxu0
        %v703 = vadd.f32 %v586, %v702
        %704 = vmatmul.bf16.gmra.mxu0 %v635
        %v705 = vpop.f32.mrf.mxu0
        %v706 = vadd.f32 %v586, %v705
        %v707 = vpop.f32.mrf.mxu0
        %v708 = vadd.f32 %v586, %v707
        %709 = vmatmul.bf16.gmra.mxu0 %v638
        %v710 = vpop.f32.mrf.mxu0
        %v711 = vadd.f32 %v586, %v710
        %v712 = vpop.f32.mrf.mxu0
        %v713 = vadd.f32 %v586, %v712
        %714 = vmatmul.bf16.gmra.mxu0 %v641
        %v715 = vpop.f32.mrf.mxu0
        %v716 = vadd.f32 %v586, %v715
        %v717 = vpop.f32.mrf.mxu0
        %v718 = vadd.f32 %v586, %v717
        %719 = vmatmul.bf16.gmra.mxu0 %v644
        %v720 = vpop.f32.mrf.mxu0
        %v721 = vadd.f32 %v586, %v720
        %v722 = vpop.f32.mrf.mxu0
        %v723 = vadd.f32 %v586, %v722
        %724 = vmatmul.bf16.gmra.mxu0 %v647
        %v725 = vpop.f32.mrf.mxu0
        %v726 = vadd.f32 %v586, %v725
        %v727 = vpop.f32.mrf.mxu0
        %v728 = vadd.f32 %v586, %v727
        %729 = vmatmul.bf16.gmra.mxu0 %v650
        %v730 = vpop.f32.mrf.mxu0
        %v731 = vadd.f32 %v586, %v730
        %v732 = vpop.f32.mrf.mxu0
        %v733 = vadd.f32 %v586, %v732
        %734 = vmatmul.bf16.gmra.mxu0 %v653
        %v735 = vpop.f32.mrf.mxu0
        %v736 = vadd.f32 %v586, %v735
        %v737 = vpop.f32.mrf.mxu0
        %v738 = vadd.f32 %v586, %v737
        %739 = vmatmul.bf16.gmra.mxu0 %v656
        %v740 = vpop.f32.mrf.mxu0
        %v741 = vadd.f32 %v586, %v740
        %v742 = vpop.f32.mrf.mxu0
        %v743 = vadd.f32 %v586, %v742
        %744 = vmatmul.bf16.gmra.mxu0 %v659
        %v745 = vpop.f32.mrf.mxu0
        %v746 = vadd.f32 %v586, %v745
        %v747 = vpop.f32.mrf.mxu0
        %v748 = vadd.f32 %v586, %v747
        %749 = vdwg.mxu0
        %v750 = vmax.f32 %v671, 0.0
        %v751 = vmax.f32 %v673, 0.0
        %v752 = vmax.f32 %v676, 0.0
        %v753 = vmax.f32 %v678, 0.0
        %v754 = vmax.f32 %v681, 0.0
        %v755 = vmax.f32 %v683, 0.0
        %v756 = vmax.f32 %v686, 0.0
        %v757 = vmax.f32 %v688, 0.0
        %v758 = vmax.f32 %v691, 0.0
        %v759 = vmax.f32 %v693, 0.0
        %v760 = vmax.f32 %v696, 0.0
        %v761 = vmax.f32 %v698, 0.0
        %v762 = vmax.f32 %v701, 0.0
        %v763 = vmax.f32 %v703, 0.0
        %v764 = vmax.f32 %v706, 0.0
        %v765 = vmax.f32 %v708, 0.0
        %v766 = vmax.f32 %v711, 0.0
        %v767 = vmax.f32 %v713, 0.0
        %v768 = vmax.f32 %v716, 0.0
        %v769 = vmax.f32 %v718, 0.0
        %v770 = vmax.f32 %v721, 0.0
        %v771 = vmax.f32 %v723, 0.0
        %v772 = vmax.f32 %v726, 0.0
        %v773 = vmax.f32 %v728, 0.0
        %v774 = vmax.f32 %v731, 0.0
        %v775 = vmax.f32 %v733, 0.0
        %v776 = vmax.f32 %v736, 0.0
        %v777 = vmax.f32 %v738, 0.0
        %v778 = vmax.f32 %v741, 0.0
        %v779 = vmax.f32 %v743, 0.0
        %v780 = vmax.f32 %v746, 0.0
        %v781 = vmax.f32 %v748, 0.0
        %v782 = vmax.f32 %v750, %v751
        %v783 = vrot.slane %v782, 4
        %v784 = vmax.f32 %v782, %v783
        %v785 = vrot.slane %v784, 2
        %v786 = vmax.f32 %v784, %v785
        %v787 = vrot.slane %v786, 1
        %v788 = vmax.f32 %v786, %v787
        %v789 = vmax.f32 %v752, %v753
        %v790 = vrot.slane %v789, 4
        %v791 = vmax.f32 %v789, %v790
        %v792 = vrot.slane %v791, 2
        %v793 = vmax.f32 %v791, %v792
        %v794 = vrot.slane %v793, 1
        %v795 = vmax.f32 %v793, %v794
        %v796 = vmax.f32 %v754, %v755
        %v797 = vrot.slane %v796, 4
        %v798 = vmax.f32 %v796, %v797
        %v799 = vrot.slane %v798, 2
        %v800 = vmax.f32 %v798, %v799
        %v801 = vrot.slane %v800, 1
        %v802 = vmax.f32 %v800, %v801
        %v803 = vmax.f32 %v756, %v757
        %v804 = vrot.slane %v803, 4
        %v805 = vmax.f32 %v803, %v804
        %v806 = vrot.slane %v805, 2
        %v807 = vmax.f32 %v805, %v806
        %v808 = vrot.slane %v807, 1
        %v809 = vmax.f32 %v807, %v808
        %v810 = vmax.f32 %v758, %v759
        %v811 = vrot.slane %v810, 4
        %v812 = vmax.f32 %v810, %v811
        %v813 = vrot.slane %v812, 2
        %v814 = vmax.f32 %v812, %v813
        %v815 = vrot.slane %v814, 1
        %v816 = vmax.f32 %v814, %v815
        %v817 = vmax.f32 %v760, %v761
        %v818 = vrot.slane %v817, 4
        %v819 = vmax.f32 %v817, %v818
        %v820 = vrot.slane %v819, 2
        %v821 = vmax.f32 %v819, %v820
        %v822 = vrot.slane %v821, 1
        %v823 = vmax.f32 %v821, %v822
        %v824 = vmax.f32 %v762, %v763
        %v825 = vrot.slane %v824, 4
        %v826 = vmax.f32 %v824, %v825
        %v827 = vrot.slane %v826, 2
        %v828 = vmax.f32 %v826, %v827
        %v829 = vrot.slane %v828, 1
        %v830 = vmax.f32 %v828, %v829
        %v831 = vmax.f32 %v764, %v765
        %v832 = vrot.slane %v831, 4
        %v833 = vmax.f32 %v831, %v832
        %v834 = vrot.slane %v833, 2
        %v835 = vmax.f32 %v833, %v834
        %v836 = vrot.slane %v835, 1
        %v837 = vmax.f32 %v835, %v836
        %v838 = vmax.f32 %v766, %v767
        %v839 = vrot.slane %v838, 4
        %v840 = vmax.f32 %v838, %v839
        %v841 = vrot.slane %v840, 2
        %v842 = vmax.f32 %v840, %v841
        %v843 = vrot.slane %v842, 1
        %v844 = vmax.f32 %v842, %v843
        %v845 = vmax.f32 %v768, %v769
        %v846 = vrot.slane %v845, 4
        %v847 = vmax.f32 %v845, %v846
        %v848 = vrot.slane %v847, 2
        %v849 = vmax.f32 %v847, %v848
        %v850 = vrot.slane %v849, 1
        %v851 = vmax.f32 %v849, %v850
        %v852 = vmax.f32 %v770, %v771
        %v853 = vrot.slane %v852, 4
        %v854 = vmax.f32 %v852, %v853
        %v855 = vrot.slane %v854, 2
        %v856 = vmax.f32 %v854, %v855
        %v857 = vrot.slane %v856, 1
        %v858 = vmax.f32 %v856, %v857
        %v859 = vmax.f32 %v772, %v773
        %v860 = vrot.slane %v859, 4
        %v861 = vmax.f32 %v859, %v860
        %v862 = vrot.slane %v861, 2
        %v863 = vmax.f32 %v861, %v862
        %v864 = vrot.slane %v863, 1
        %v865 = vmax.f32 %v863, %v864
        %v866 = vmax.f32 %v774, %v775
        %v867 = vrot.slane %v866, 4
        %v868 = vmax.f32 %v866, %v867
        %v869 = vrot.slane %v868, 2
        %v870 = vmax.f32 %v868, %v869
        %v871 = vrot.slane %v870, 1
        %v872 = vmax.f32 %v870, %v871
        %v873 = vmax.f32 %v776, %v777
        %v874 = vrot.slane %v873, 4
        %v875 = vmax.f32 %v873, %v874
        %v876 = vrot.slane %v875, 2
        %v877 = vmax.f32 %v875, %v876
        %v878 = vrot.slane %v877, 1
        %v879 = vmax.f32 %v877, %v878
        %v880 = vmax.f32 %v778, %v779
        %v881 = vrot.slane %v880, 4
        %v882 = vmax.f32 %v880, %v881
        %v883 = vrot.slane %v882, 2
        %v884 = vmax.f32 %v882, %v883
        %v885 = vrot.slane %v884, 1
        %v886 = vmax.f32 %v884, %v885
        %v887 = vmax.f32 %v780, %v781
        %v888 = vrot.slane %v887, 4
        %v889 = vmax.f32 %v887, %v888
        %v890 = vrot.slane %v889, 2
        %v891 = vmax.f32 %v889, %v890
        %v892 = vrot.slane %v891, 1
        %v893 = vmax.f32 %v891, %v892
        %vm910 = vcmask 1041409
        %v911 = vsel %vm910, %v795, %v788
        %vm912 = vcmask 1042434
        %v913 = vsel %vm912, %v802, %v911
        %vm914 = vcmask 1043459
        %v915 = vsel %vm914, %v809, %v913
        %vm916 = vcmask 1044484
        %v917 = vsel %vm916, %v816, %v915
        %vm918 = vcmask 1045509
        %v919 = vsel %vm918, %v823, %v917
        %vm920 = vcmask 1046534
        %v921 = vsel %vm920, %v830, %v919
        %vm922 = vcmask 1047559
        %v923 = vsel %vm922, %v837, %v921
        %v924 = vsel %vm910, %v851, %v844
        %v925 = vsel %vm912, %v858, %v924
        %v926 = vsel %vm914, %v865, %v925
        %v927 = vsel %vm916, %v872, %v926
        %v928 = vsel %vm918, %v879, %v927
        %v929 = vsel %vm920, %v886, %v928
        %v930 = vsel %vm922, %v893, %v929
        %933 = vst [vmem:[%s244] sm:$0xff] %v923
        %934 = vst [vmem:[%s244 + $0x8] sm:$0xff] %v930
        %s935 = sand.u32 %s153, 1
        %s936 = scalar_lea.sflag [#allocation3], %s935
        %s937 = sand.u32 %s153, 1
        %s938 = smul.addr %s937, 16
        %s939 = scalar_lea.vmem [#allocation2], %s938
        // Predicated region
        $region41: #{pointnet_sa_forward.1} parent=39 // pred_check
          %p940 = pneg %p163
        $region42: #{pointnet_sa_forward.1} parent=39 // pred_check_branch
          %942 = sbr.rel (%p940) target = $region44
        $region43: #{pointnet_sa_forward.1} parent=39 // pred_region
          %s943 = smul.u32 2, %s24
          %945 = vsyncadd %s936, 0
          %s946 = smul.addr %s23, 2
          %s947 = sadd.s32 %s943, %s946
          %s948 = smul.addr %s947, 8
          %s949 = scalar_lea.hbm %s5, %s948
          %s950 = sshll.u32 %s939, 4
          %s951 = int_to_ptr.vmem [resolvable:$true] %s950
          %s952 = sshll.u32 %s949, 4
          %s953 = int_to_ptr.hbm [resolvable:$true] %s952
          %958 = dma.vmem_to_hbm [thread:$0]  %s951, 256, %s953, %s936, 128, 128, 8
        $region44: #{pointnet_sa_forward.1} parent=39 // pred_fallthru
          _
      $region40: #{pointnet_sa_forward.1} parent=5 // pred_fallthru
        _
      %p959 = scmp.le.s32.totalorder 2, %s14
      // Predicated region
      $region45: #{pointnet_sa_forward.1} parent=5 // pred_check
        %p960 = pneg %p959
      $region46: #{pointnet_sa_forward.1} parent=5 // pred_check_branch
        %962 = sbr.rel (%p960) target = $region48
      $region47: #{pointnet_sa_forward.1} parent=5 // pred_region
        %s963 = ssub.s32 %s14, 2
        // Predicated region
        $region49: #{pointnet_sa_forward.1} parent=47 // pred_check
          %p964 = pneg %p169
        $region50: #{pointnet_sa_forward.1} parent=47 // pred_check_branch
          %966 = sbr.rel (%p964) target = $region52
        $region51: #{pointnet_sa_forward.1} parent=47 // pred_region
          %s967 = sand.u32 %s154, 1
          %s968 = scalar_lea.sflag [#allocation3], %s967
          %s969 = sand.u32 %s154, 1
          %s970 = smul.addr %s969, 16
          %s971 = scalar_lea.vmem [#allocation2], %s970
          %973 = dma.done %s968, 256
        $region52: #{pointnet_sa_forward.1} parent=47 // pred_fallthru
          _
      $region48: #{pointnet_sa_forward.1} parent=5 // pred_fallthru
        _
    $region6: #{pointnet_sa_forward.1} parent=1 // loop_footer
      %s18 = sadd.s32 1, %s14
    $region7: #{pointnet_sa_forward.1} parent=1 // loop_footer_branch
      %13 = sbr.rel target = $region3
    $region8: #{pointnet_sa_forward.1} parent=1 // loop_exit
      _
    %974 = vsyncpa [#allocation3], 1
    %s975 = scalar_lea.sflag [#allocation3], 1
    %976 = vsyncpa %s975, 1

</llo_original>
